<compile_context>
chip_gen: v6e
topology: v6e:2x2x1
jax: 0.10.0
libtpu: 0.0.40
codegen_flags: <defaults>
</compile_context>

<pallas_src>
import functools

import jax
import jax.numpy as jnp
from jax import lax
from jax.experimental import pallas as pl
from jax.experimental.pallas import tpu as pltpu

EPS = 1e-5
LANE = 128


def _round_up(x, m):
    return (x + m - 1) // m * m


def _compiler_params():
    return pltpu.CompilerParams(
        dimension_semantics=("parallel",),
        vmem_limit_bytes=32 * 1024 * 1024,
    )


# ----------------------------- Pallas kernels ------------------------------

def channel_stats_kernel(x_ref, s_ref, ss_ref):
    """Per-channel sum / sum-of-squares of one batch of the phase-split slab.

    x: (1, 2*C, LPH); pad columns are exact zeros, so plain lane sums already
    equal the sums over valid elements.  Even/odd phase rows of the same
    channel are folded together.
    """
    x = x_ref[0].astype(jnp.float32)                      # (2C, LPH)
    c = x.shape[0] // 2
    s = jnp.sum(x, axis=1, keepdims=True)                 # (2C, 1)
    ss = jnp.sum(x * x, axis=1, keepdims=True)
    s_ref[0] = s[:c] + s[c:]
    ss_ref[0] = ss[:c] + ss[c:]


def bn_relu_conv1_kernel(x_ref, sc_ref, sh_ref, w_ref, b_ref,
                         y_ref, s_ref, ss_ref, *, L_out, Lh, conv_dtype):
    """bn_in + ReLU + Conv1d(k=5, s=2, p=1) + per-batch bn_out partial sums.

    x : (1, 2*C_in, LPH) phase-split slab; slab col m+1 holds input pos 2m / 2m+1
    sc/sh : (2*C_in, 1) fused BN scale / shift (gamma*rstd, beta - mean*gamma*rstd)
    w : (5, C_out, C_in), b : (C_out, 1)
    y : (1, C_out, LPY) output slab (col 0 = conv2 left pad, cols 1..L_out data)
    """
    C2, LPH = x_ref.shape[1], x_ref.shape[2]
    C_in = C2 // 2
    C_out, LPY = y_ref.shape[1], y_ref.shape[2]

    x = x_ref[0].astype(jnp.float32)
    h = jnp.maximum(x * sc_ref[...] + sh_ref[...], 0.0)    # BN (batch stats) + ReLU
    # Zero the pad columns so the conv sees true zero padding after BN/ReLU.
    col = lax.broadcasted_iota(jnp.int32, (C2, LPH), 1)
    h = jnp.where((col >= 1) & (col <= Lh), h, 0.0)
    he = h[:C_in].astype(conv_dtype)                       # even phase
    ho = h[C_in:].astype(conv_dtype)                       # odd phase

    # Stride-2 conv as 5 shifted matmuls: output l uses inputs 2l-1 .. 2l+3.
    taps = (ho[:, 0:L_out],          # k=0 -> input 2l-1
            he[:, 1:1 + L_out],      # k=1 -> input 2l
            ho[:, 1:1 + L_out],      # k=2 -> input 2l+1
            he[:, 2:2 + L_out],      # k=3 -> input 2l+2
            ho[:, 2:2 + L_out])      # k=4 -> input 2l+3
    acc = jnp.zeros((C_out, L_out), jnp.float32)
    for k in range(5):
        acc = acc + jnp.dot(w_ref[k], taps[k],
                            preferred_element_type=jnp.float32)
    y = acc + b_ref[...]                                    # (C_out, L_out)

    # Per-batch partial sums for bn_out (finalized in the wrapper).
    s_ref[0] = jnp.sum(y, axis=1, keepdims=True)
    ss_ref[0] = jnp.sum(y * y, axis=1, keepdims=True)

    # Lane-dense full-width store: [1 zero col | data | zero tail].
    y_ref[0] = jnp.concatenate(
        [jnp.zeros((C_out, 1), y_ref.dtype),
         y.astype(y_ref.dtype),
         jnp.zeros((C_out, LPY - 1 - L_out), y_ref.dtype)], axis=1)


def bn_relu_conv2_res_kernel(y_ref, sc_ref, sh_ref, w_ref, b_ref, o_ref,
                             *, L_out, conv_dtype):
    """bn_out + ReLU + Conv1d(k=3, s=1, p=1) + residual add (= ResidualBlock)."""
    C_out, LPY = y_ref.shape[1], y_ref.shape[2]
    y = y_ref[0].astype(jnp.float32)
    z = jnp.maximum(y * sc_ref[...] + sh_ref[...], 0.0)
    col = lax.broadcasted_iota(jnp.int32, (C_out, LPY), 1)
    z = jnp.where((col >= 1) & (col <= L_out), z, 0.0)      # zero conv padding
    zc = z.astype(conv_dtype)

    acc = jnp.zeros((C_out, L_out), jnp.float32)
    for k in range(3):                                       # taps at cols k .. k+L_out-1
        acc = acc + jnp.dot(w_ref[k], zc[:, k:k + L_out],
                            preferred_element_type=jnp.float32)
    out = acc + b_ref[...] + z[:, 1:1 + L_out]               # conv2 + bias + residual

    o_ref[0] = jnp.concatenate(
        [out.astype(o_ref.dtype),
         jnp.zeros((C_out, LPY - L_out), o_ref.dtype)], axis=1)


# ------------------------------- wrapper ------------------------------------

def cnn_block_forward(x, params, conv_dtype=jnp.bfloat16):
    """Forward pass of CNN_block.  x: (N, C_in, L) (PyTorch NCL layout)."""
    N, C_in, L = x.shape
    assert L % 2 == 0, "stride-2 phase split assumes an even input length"
    W1, b1 = params["conv_w"], params["conv_b"]
    W2, b2 = params["res_conv2_w"], params["res_conv2_b"]
    C_out = W1.shape[0]
    K1, S1, P1 = 5, 2, 1                                    # CNN_block.conv
    K2 = 3                                                  # ResidualBlock.conv2 (s=1,p=1)
    L_out = (L + 2 * P1 - K1) // S1 + 1
    Lh = L // 2
    LPH = _round_up(max(Lh + 1, L_out + 2), LANE)
    LPY = _round_up(L_out + 2, LANE)
    cp = _compiler_params()
    itemsz = jnp.dtype(conv_dtype).itemsize

    # Phase-split, zero-padded input slab (single XLA layout pass; no im2col).
    x_ph = jnp.concatenate([x[:, :, 0::2], x[:, :, 1::2]], axis=1)   # (N, 2C_in, Lh)
    xs = jnp.pad(x_ph, ((0, 0), (0, 0), (1, LPH - 1 - Lh)))          # (N, 2C_in, LPH)

    # ---------------- pass 1: bn_in batch statistics -------------------------
    s_in, ss_in = pl.pallas_call(
        channel_stats_kernel,
        grid=(N,),
        in_specs=[pl.BlockSpec((1, 2 * C_in, LPH), lambda n: (n, 0, 0))],
        out_specs=(pl.BlockSpec((1, C_in, 1), lambda n: (n, 0, 0)),
                   pl.BlockSpec((1, C_in, 1), lambda n: (n, 0, 0))),
        out_shape=(jax.ShapeDtypeStruct((N, C_in, 1), jnp.float32),
                   jax.ShapeDtypeStruct((N, C_in, 1), jnp.float32)),
        compiler_params=cp,
        cost_estimate=pl.CostEstimate(flops=2 * xs.size, transcendentals=0,
                                      bytes_accessed=xs.size * 4),
    )(xs)
    cnt = jnp.float32(N * L)
    mean_in = s_in.sum(axis=0)[:, 0] / cnt
    var_in = ss_in.sum(axis=0)[:, 0] / cnt - mean_in ** 2           # biased, like torch
    sc_in = params["bn_in_gamma"] * lax.rsqrt(var_in + EPS)
    sh_in = params["bn_in_beta"] - mean_in * sc_in
    sc_in2 = jnp.tile(sc_in.reshape(C_in, 1), (2, 1))               # per phase-split row
    sh_in2 = jnp.tile(sh_in.reshape(C_in, 1), (2, 1))

    # -------- pass 2: bn_in + ReLU + conv1 (+ bn_out partial sums) -----------
    w1 = jnp.transpose(W1, (2, 0, 1)).astype(conv_dtype)            # (K1, C_out, C_in)
    b1c = b1.reshape(C_out, 1).astype(jnp.float32)
    y_slab, s_out, ss_out = pl.pallas_call(
        functools.partial(bn_relu_conv1_kernel, L_out=L_out, Lh=Lh,
                          conv_dtype=conv_dtype),
        grid=(N,),
        in_specs=[pl.BlockSpec((1, 2 * C_in, LPH), lambda n: (n, 0, 0)),
                  pl.BlockSpec((2 * C_in, 1), lambda n: (0, 0)),
                  pl.BlockSpec((2 * C_in, 1), lambda n: (0, 0)),
                  pl.BlockSpec((K1, C_out, C_in), lambda n: (0, 0, 0)),
                  pl.BlockSpec((C_out, 1), lambda n: (0, 0))],
        out_specs=(pl.BlockSpec((1, C_out, LPY), lambda n: (n, 0, 0)),
                   pl.BlockSpec((1, C_out, 1), lambda n: (n, 0, 0)),
                   pl.BlockSpec((1, C_out, 1), lambda n: (n, 0, 0))),
        out_shape=(jax.ShapeDtypeStruct((N, C_out, LPY), conv_dtype),
                   jax.ShapeDtypeStruct((N, C_out, 1), jnp.float32),
                   jax.ShapeDtypeStruct((N, C_out, 1), jnp.float32)),
        compiler_params=cp,
        cost_estimate=pl.CostEstimate(
            flops=2 * N * L_out * C_out * C_in * K1, transcendentals=0,
            bytes_accessed=(xs.size * 4 + N * C_out * LPY * itemsz
                            + w1.size * itemsz)),
    )(xs, sc_in2, sh_in2, w1, b1c)

    cnt2 = jnp.float32(N * L_out)
    mean_o = s_out.sum(axis=0)[:, 0] / cnt2
    var_o = ss_out.sum(axis=0)[:, 0] / cnt2 - mean_o ** 2
    sc_o = params["bn_out_gamma"] * lax.rsqrt(var_o + EPS)
    sh_o = params["bn_out_beta"] - mean_o * sc_o

    # ------------- pass 3: bn_out + ReLU + conv2 + residual ------------------
    w2 = jnp.transpose(W2, (2, 0, 1)).astype(conv_dtype)            # (K2, C_out, C_out)
    b2c = b2.reshape(C_out, 1).astype(jnp.float32)
    out_slab = pl.pallas_call(
        functools.partial(bn_relu_conv2_res_kernel, L_out=L_out,
                          conv_dtype=conv_dtype),
        grid=(N,),
        in_specs=[pl.BlockSpec((1, C_out, LPY), lambda n: (n, 0, 0)),
                  pl.BlockSpec((C_out, 1), lambda n: (0, 0)),
                  pl.BlockSpec((C_out, 1), lambda n: (0, 0)),
                  pl.BlockSpec((K2, C_out, C_out), lambda n: (0, 0, 0)),
                  pl.BlockSpec((C_out, 1), lambda n: (0, 0))],
        out_specs=pl.BlockSpec((1, C_out, LPY), lambda n: (n, 0, 0)),
        out_shape=jax.ShapeDtypeStruct((N, C_out, LPY), x.dtype),
        compiler_params=cp,
        cost_estimate=pl.CostEstimate(
            flops=2 * N * L_out * C_out * C_out * K2, transcendentals=0,
            bytes_accessed=(N * C_out * LPY * (itemsz + 4) + w2.size * itemsz)),
    )(y_slab, sc_o.reshape(C_out, 1), sh_o.reshape(C_out, 1), w2, b2c)

    return out_slab[:, :, :L_out]                                   # (N, C_out, L_out)


# ------------------------- params / reference / main ------------------------

def init_params(key, C_in, C_out):
    ks = jax.random.split(key, 4)

    def u(k, shape, fan_in):
        bound = 1.0 / jnp.sqrt(jnp.float32(fan_in))
        return jax.random.uniform(k, shape, jnp.float32, -bound, bound)

    return {
        "bn_in_gamma": jnp.ones((C_in,), jnp.float32),
        "bn_in_beta": jnp.zeros((C_in,), jnp.float32),
        "conv_w": u(ks[0], (C_out, C_in, 5), C_in * 5),
        "conv_b": u(ks[1], (C_out,), C_in * 5),
        "bn_out_gamma": jnp.ones((C_out,), jnp.float32),
        "bn_out_beta": jnp.zeros((C_out,), jnp.float32),
        "res_conv2_w": u(ks[2], (C_out, C_out, 3), C_out * 3),
        "res_conv2_b": u(ks[3], (C_out,), C_out * 3),
    }


def reference_forward(x, params):
    def bn(v, g, b):
        m = v.mean(axis=(0, 2), keepdims=True)
        var = ((v - m) ** 2).mean(axis=(0, 2), keepdims=True)
        return (v - m) / jnp.sqrt(var + EPS) * g.reshape(1, -1, 1) + b.reshape(1, -1, 1)

    def conv(v, w, b, stride, pad):
        out = lax.conv_general_dilated(
            v, w, window_strides=(stride,), padding=[(pad, pad)],
            dimension_numbers=("NCH", "OIH", "NCH"))
        return out + b.reshape(1, -1, 1)

    h = jax.nn.relu(bn(x, params["bn_in_gamma"], params["bn_in_beta"]))
    h = conv(h, params["conv_w"], params["conv_b"], 2, 1)
    h = jax.nn.relu(bn(h, params["bn_out_gamma"], params["bn_out_beta"]))
    # ResidualBlock collapses to conv2(h) + h (conv1/bn/relu results are
    # overwritten before use in the reference forward).
    return conv(h, params["res_conv2_w"], params["res_conv2_b"], 1, 1) + h


if __name__ == "__main__":
    N, C_in, C_out, L = 2, 4, 8, 16
    key = jax.random.PRNGKey(0)
    kx, kp = jax.random.split(key)
    x = jax.random.normal(kx, (N, C_in, L), jnp.float32)
    params = init_params(kp, C_in, C_out)

    ref = jax.block_until_ready(reference_forward(x, params))

    # f32 MXU path: strict correctness check against the pure-JAX reference.
    out_f32 = jax.block_until_ready(
        cnn_block_forward(x, params, conv_dtype=jnp.float32))
    assert out_f32.shape == ref.shape, (out_f32.shape, ref.shape)
    assert jnp.allclose(out_f32, ref, atol=5e-4, rtol=5e-4), float(
        jnp.max(jnp.abs(out_f32 - ref)))

    # bf16 MXU path (production default): looser tolerance for bf16 operands.
    out_bf16 = jax.block_until_ready(
        cnn_block_forward(x, params, conv_dtype=jnp.bfloat16))
    assert out_bf16.shape == ref.shape, (out_bf16.shape, ref.shape)
    assert jnp.allclose(out_bf16, ref, atol=1e-1, rtol=1e-1), float(
        jnp.max(jnp.abs(out_bf16 - ref)))

    print("KERNEL_OK")
</pallas_src>

<mosaic_0001>
module attributes {stable_mosaic.version = 11 : i64} {
  func.func @channel_stats_kernel(%arg0: i32, %arg1: memref<1x8x128xf32, #tpu.memory_space<vmem>>, %arg2: memref<1x4x1xf32, #tpu.memory_space<vmem>>, %arg3: memref<1x4x1xf32, #tpu.memory_space<vmem>>) attributes {dimension_semantics = [#tpu.dimension_semantics<parallel>], iteration_bounds = array<i64: 2>, scalar_prefetch = 0 : i64, scratch_operands = 0 : i64, tpu.core_type = #tpu.core_type<tc>, window_params = [{transform_indices = @transform_0, window_bounds = array<i64: 1, 8, 128>}, {transform_indices = @transform_1, window_bounds = array<i64: 1, 4, 1>}, {transform_indices = @transform_2, window_bounds = array<i64: 1, 4, 1>}]} {
    %c0 = arith.constant 0 : index
    %c0_0 = arith.constant 0 : index
    %c0_1 = arith.constant 0 : index
    %0 = vector.load %arg1[%c0, %c0_0, %c0_1] : memref<1x8x128xf32, #tpu.memory_space<vmem>>, vector<1x8x128xf32>
    %1 = vector.shape_cast %0 : vector<1x8x128xf32> to vector<8x128xf32>
    %cst = arith.constant dense<0.000000e+00> : vector<8xf32>
    %2 = vector.multi_reduction <add>, %1, %cst [1] : vector<8x128xf32> to vector<8xf32>
    %3 = vector.shape_cast %2 : vector<8xf32> to vector<8x1xf32>
    %4 = arith.mulf %1, %1 : vector<8x128xf32>
    %cst_2 = arith.constant dense<0.000000e+00> : vector<8xf32>
    %5 = vector.multi_reduction <add>, %4, %cst_2 [1] : vector<8x128xf32> to vector<8xf32>
    %6 = vector.shape_cast %5 : vector<8xf32> to vector<8x1xf32>
    %7 = vector.extract_strided_slice %3 {offsets = [0, 0], sizes = [4, 1], strides = [1, 1]} : vector<8x1xf32> to vector<4x1xf32>
    %8 = vector.extract_strided_slice %3 {offsets = [4, 0], sizes = [4, 1], strides = [1, 1]} : vector<8x1xf32> to vector<4x1xf32>
    %9 = arith.addf %7, %8 : vector<4x1xf32>
    %c0_3 = arith.constant 0 : index
    %c0_4 = arith.constant 0 : index
    %c0_5 = arith.constant 0 : index
    %10 = vector.load %arg2[%c0_3, %c0_4, %c0_5] : memref<1x4x1xf32, #tpu.memory_space<vmem>>, vector<1x4x1xf32>
    %11 = vector.shape_cast %10 : vector<1x4x1xf32> to vector<4x1xf32>
    %12 = vector.shape_cast %9 : vector<4x1xf32> to vector<1x4x1xf32>
    tpu.vector_store %arg2[%c0_3, %c0_4, %c0_5], %12 {strides = array<i32>} : memref<1x4x1xf32, #tpu.memory_space<vmem>>, vector<1x4x1xf32>,
    %13 = vector.extract_strided_slice %6 {offsets = [0, 0], sizes = [4, 1], strides = [1, 1]} : vector<8x1xf32> to vector<4x1xf32>
    %14 = vector.extract_strided_slice %6 {offsets = [4, 0], sizes = [4, 1], strides = [1, 1]} : vector<8x1xf32> to vector<4x1xf32>
    %15 = arith.addf %13, %14 : vector<4x1xf32>
    %c0_6 = arith.constant 0 : index
    %c0_7 = arith.constant 0 : index
    %c0_8 = arith.constant 0 : index
    %16 = vector.load %arg3[%c0_6, %c0_7, %c0_8] : memref<1x4x1xf32, #tpu.memory_space<vmem>>, vector<1x4x1xf32>
    %17 = vector.shape_cast %16 : vector<1x4x1xf32> to vector<4x1xf32>
    %18 = vector.shape_cast %15 : vector<4x1xf32> to vector<1x4x1xf32>
    tpu.vector_store %arg3[%c0_6, %c0_7, %c0_8], %18 {strides = array<i32>} : memref<1x4x1xf32, #tpu.memory_space<vmem>>, vector<1x4x1xf32>,
    return
  }
  func.func @transform_0(%arg0: i32) -> (i32, i32, i32) {
    %c0_i32 = arith.constant 0 : i32
    %c0_i32_0 = arith.constant 0 : i32
    %c0_i32_1 = arith.constant 0 : i32
    return %arg0, %c0_i32, %c0_i32_0 : i32, i32, i32
  }
  func.func @transform_1(%arg0: i32) -> (i32, i32, i32) {
    %c0_i32 = arith.constant 0 : i32
    %c0_i32_0 = arith.constant 0 : i32
    %c0_i32_1 = arith.constant 0 : i32
    return %arg0, %c0_i32, %c0_i32_0 : i32, i32, i32
  }
  func.func @transform_2(%arg0: i32) -> (i32, i32, i32) {
    %c0_i32 = arith.constant 0 : i32
    %c0_i32_0 = arith.constant 0 : i32
    %c0_i32_1 = arith.constant 0 : i32
    return %arg0, %c0_i32, %c0_i32_0 : i32, i32, i32
  }
}

</mosaic_0001>

<llo_original>
// kernel: tpu_custom_call.1
$region0: #{tpu_custom_call.1}
  #allocation0 [shape = 'u32[]', space=smem, size = 0x4, offset = 0x4, fixed_abs, tag = 'smem constant byte address 0x4 - core index']
  #allocation1 [shape = 'u32[144,128]{1,0:T(1,128)}', space=vmem, size = 0x12000, scoped, tag = 'internal scratch']
  %s0 = inlined_call_operand.hbm [shape: f32[2,8,128], index: 0, kind: input, shape index: {}]
  %s1 = inlined_call_operand.vmem [shape: f32[2,4,1], index: 1, kind: output, shape index: {0}]
  %s2 = inlined_call_operand.vmem [shape: f32[2,4,1], index: 2, kind: output, shape index: {1}]
  %3 = xla_tuple %s1, %s2
  %s4 = sld [smem:[#allocation0]]
  $region49: #{tpu_custom_call.1} parent=0
    _
  %s6 = ssub.s32 1, %s4
  %s7 = scalar_select 0, %s6, %s4
  $region1: #{tpu_custom_call.1} parent=0
    #allocation2 [shape = 'u8[8192]{0}', space=vmem, size = 0x2000, scoped, tag = 'input window, operand 0']
    #allocation3 [shape = 's32[2]{0}', space=sflag, size = 0x8, scoped, tag = 'scoped memory for tpu_custom_call.1']
    %8 = vsyncpa [#allocation3], 0
    %s9 = scalar_lea.sflag [#allocation3], 1
    %10 = vsyncpa %s9, 0
    loop: start=0, step=1, limit=4
    $region2: #{tpu_custom_call.1} parent=1 // loop_pre_header
      _
    $region3: #{tpu_custom_call.1} parent=1 // loop_header
      %s12 = sphi 0, %s16
      %p13 = scmp.ge.s32.totalorder %s12, 4
      %s22 = sphi 0, %s24
      %s25 = sphi 0, %s22
      %s26 = sphi 0, %s25
      %s42 = sphi 0, %s26
      %s48 = sphi 0, %s50
      %s51 = sphi 0, %s48
      %s52 = sphi 0, %s51
      %s68 = sphi 0, %s52
      %s74 = sphi 0, %s76
      %s77 = sphi 0, %s74
      %s78 = sphi 0, %s77
      %s94 = sphi 0, %s78
    $region4: #{tpu_custom_call.1} parent=1 // loop_header_branch
      %15 = sbr.rel (%p13) target = $region8
    $region5: #{tpu_custom_call.1} parent=1 // loop_body
      %s17 = ssub.s32 %s12, 1
      %s18 = ssub.s32 %s12, 2
      %s19 = sadd.s32 %s12, 1
      %s20 = ssub.s32 %s12, %s19
      %p21 = scmp.eq.s32.totalorder %s20, 0
      %s23 = sadd.s32 %s22, 1
      %s24 = scalar_select %p21, %s22, %s23
      %p27 = pneg %p21
      %p28 = scmp.eq.s32.totalorder %s12, 1
      %p29 = por %p27, %p28
      %p30 = scmp.ne.s32.totalorder %s22, %s25
      %p31 = scmp.eq.s32.totalorder %s12, 0
      %p32 = por %p30, %p31
      %p33 = scmp.ne.s32.totalorder %s22, %s25
      %p34 = scmp.eq.s32.totalorder %s17, 1
      %p35 = por %p33, %p34
      %p36 = scmp.ne.s32.totalorder %s25, %s26
      %p37 = scmp.eq.s32.totalorder %s17, 0
      %p38 = por %p36, %p37
      %p39 = scmp.ne.s32.totalorder %s25, %s26
      %p40 = scmp.eq.s32.totalorder %s18, 1
      %p41 = por %p39, %p40
      %p43 = scmp.ne.s32.totalorder %s26, %s42
      %p44 = scmp.eq.s32.totalorder %s18, 0
      %p45 = por %p43, %p44
      %s46 = ssub.s32 %s12, %s19
      %p47 = scmp.eq.s32.totalorder %s46, 0
      %s49 = sadd.s32 %s48, 1
      %s50 = scalar_select %p47, %s48, %s49
      %p53 = pneg %p47
      %p54 = scmp.eq.s32.totalorder %s12, 1
      %p55 = por %p53, %p54
      %p56 = scmp.ne.s32.totalorder %s48, %s51
      %p57 = scmp.eq.s32.totalorder %s12, 0
      %p58 = por %p56, %p57
      %p59 = scmp.ne.s32.totalorder %s48, %s51
      %p60 = scmp.eq.s32.totalorder %s17, 1
      %p61 = por %p59, %p60
      %p62 = scmp.ne.s32.totalorder %s51, %s52
      %p63 = scmp.eq.s32.totalorder %s17, 0
      %p64 = por %p62, %p63
      %p65 = scmp.ne.s32.totalorder %s51, %s52
      %p66 = scmp.eq.s32.totalorder %s18, 1
      %p67 = por %p65, %p66
      %p69 = scmp.ne.s32.totalorder %s52, %s68
      %p70 = scmp.eq.s32.totalorder %s18, 0
      %p71 = por %p69, %p70
      %s72 = ssub.s32 %s12, %s19
      %p73 = scmp.eq.s32.totalorder %s72, 0
      %s75 = sadd.s32 %s74, 1
      %s76 = scalar_select %p73, %s74, %s75
      %p79 = pneg %p73
      %p80 = scmp.eq.s32.totalorder %s12, 1
      %p81 = por %p79, %p80
      %p82 = scmp.ne.s32.totalorder %s74, %s77
      %p83 = scmp.eq.s32.totalorder %s12, 0
      %p84 = por %p82, %p83
      %p85 = scmp.ne.s32.totalorder %s74, %s77
      %p86 = scmp.eq.s32.totalorder %s17, 1
      %p87 = por %p85, %p86
      %p88 = scmp.ne.s32.totalorder %s77, %s78
      %p89 = scmp.eq.s32.totalorder %s17, 0
      %p90 = por %p88, %p89
      %p91 = scmp.ne.s32.totalorder %s77, %s78
      %p92 = scmp.eq.s32.totalorder %s18, 1
      %p93 = por %p91, %p92
      %p95 = scmp.ne.s32.totalorder %s78, %s94
      %p96 = scmp.eq.s32.totalorder %s18, 0
      %p97 = por %p95, %p96
      %p98 = scmp.le.s32.totalorder 1, %s12
      %p99 = scmp.lt.s32.totalorder %s12, 3
      %p100 = pnand %p98, %p99
      %p101 = pneg %p100
      // Predicated region
      $region9: #{tpu_custom_call.1} parent=5 // pred_check
        _
      $region10: #{tpu_custom_call.1} parent=5 // pred_check_branch
        %103 = sbr.rel (%p100) target = $region12
      $region11: #{tpu_custom_call.1} parent=5 // pred_region
        %s104 = ssub.s32 %s12, 1
      $region12: #{tpu_custom_call.1} parent=5 // pred_fallthru
        _
      %p105 = scmp.lt.s32.totalorder %s12, 2
      // Predicated region
      $region13: #{tpu_custom_call.1} parent=5 // pred_check
        %p106 = pneg %p105
      $region14: #{tpu_custom_call.1} parent=5 // pred_check_branch
        %108 = sbr.rel (%p106) target = $region16
      $region15: #{tpu_custom_call.1} parent=5 // pred_region
        // Predicated region
        $region17: #{tpu_custom_call.1} parent=15 // pred_check
          %p109 = pneg %p32
        $region18: #{tpu_custom_call.1} parent=15 // pred_check_branch
          %111 = sbr.rel (%p109) target = $region20
        $region19: #{tpu_custom_call.1} parent=15 // pred_region
          %s112 = sand.u32 %s22, 1
          %s113 = scalar_lea.sflag [#allocation3], %s112
          %s114 = sand.u32 %s22, 1
          %s115 = smul.addr %s114, 8
          %s116 = scalar_lea.vmem [#allocation2], %s115
          %s118 = ssub.s32 128, 128
          %119 = vsyncadd %s113, %s118
          %s120 = smul.addr %s12, 128
          %s121 = scalar_lea.hbm %s0, %s120
          %s123 = sshll.u32 %s116, 4
          %s124 = int_to_ptr.vmem [resolvable:$true] %s123
          %126 = dma.hbm_to_vmem [thread:$0]  %s121, 128, %s124, %s113
        $region20: #{tpu_custom_call.1} parent=15 // pred_fallthru
          _
      $region16: #{tpu_custom_call.1} parent=5 // pred_fallthru
        _
      %p127 = scmp.le.s32.totalorder 1, %s12
      %p128 = scmp.lt.s32.totalorder %s12, 3
      %p129 = pnand %p127, %p128
      %p130 = pneg %p129
      // Predicated region
      $region21: #{tpu_custom_call.1} parent=5 // pred_check
        _
      $region22: #{tpu_custom_call.1} parent=5 // pred_check_branch
        %132 = sbr.rel (%p129) target = $region24
      $region23: #{tpu_custom_call.1} parent=5 // pred_region
        %s133 = ssub.s32 %s12, 1
        %s134 = sand.u32 %s25, 1
        %s135 = scalar_lea.sflag [#allocation3], %s134
        %s136 = sand.u32 %s25, 1
        %s137 = smul.addr %s136, 8
        %s138 = scalar_lea.vmem [#allocation2], %s137
        // Predicated region
        $region25: #{tpu_custom_call.1} parent=23 // pred_check
          %p139 = pneg %p38
        $region26: #{tpu_custom_call.1} parent=23 // pred_check_branch
          %141 = sbr.rel (%p139) target = $region28
        $region27: #{tpu_custom_call.1} parent=23 // pred_region
          %142 = dma.done %s135, 128
        $region28: #{tpu_custom_call.1} parent=23 // pred_fallthru
          _
        %s143 = sand.u32 %s25, 1
        %s144 = scalar_lea.sflag [#allocation3], %s143
        %s145 = sand.u32 %s25, 1
        %s146 = smul.addr %s145, 8
        %s147 = scalar_lea.vmem [#allocation2], %s146
        %p148 = pneg %p38
        %p149 = pneg %p35
        %p150 = pneg %p64
        %p151 = pneg %p61
        %p152 = scmp.lt.s32.totalorder %s17, 1
        %s153 = scalar_select %p152, %s17, 1
        %s154 = smul.addr %s153, 4
        %s155 = scalar_lea.vmem %s1, %s154
        %p156 = pneg %p90
        %p157 = pneg %p87
        %p158 = scmp.lt.s32.totalorder %s17, 1
        %s159 = scalar_select %p158, %s17, 1
        %s160 = smul.addr %s159, 4
        %s161 = scalar_lea.vmem %s2, %s160
        %p162 = scmp.lt.s32.totalorder %s17, 1
        %s163 = scalar_select %p162, %s17, 1
        %s164 = smul.addr %s163, 4
        %s165 = scalar_lea.vmem %s1, %s164
        %p166 = scmp.lt.s32.totalorder %s17, 1
        %s167 = scalar_select %p166, %s17, 1
        %s168 = smul.addr %s167, 4
        %s169 = scalar_lea.vmem %s2, %s168
        %v170 = vld [vmem:[%s138] sm:$0xff]
        %171 = vadd.xlane.f32.xlu0 %v170
        %v172 = vpop.xlane.xlu0 %171
        %v173 = vmul.f32 %v170, %v170
        %174 = vadd.xlane.f32.xlu0 %v173
        %v175 = vpop.xlane.xlu0 %174
        %v177 = vrot.slane %v172, 4
        %v179 = vadd.f32 %v172, %v177
        %vm180 = vcmask 3072
        %181 = vst.msk [vmem:[%s165] sm:$0xf] %vm180, %v179
        %v183 = vrot.slane %v175, 4
        %v185 = vadd.f32 %v175, %v183
        %186 = vst.msk [vmem:[%s169] sm:$0xf] %vm180, %v185
        %p187 = scmp.lt.s32.totalorder %s17, 1
        %s188 = scalar_select %p187, %s17, 1
        %s189 = smul.addr %s188, 4
        %s190 = scalar_lea.vmem %s1, %s189
        %p191 = scmp.lt.s32.totalorder %s17, 1
        %s192 = scalar_select %p191, %s17, 1
        %s193 = smul.addr %s192, 4
        %s194 = scalar_lea.vmem %s2, %s193
        // Predicated region
        $region29: #{tpu_custom_call.1} parent=23 // pred_check
          %p195 = pneg %p61
        $region30: #{tpu_custom_call.1} parent=23 // pred_check_branch
          %197 = sbr.rel (%p195) target = $region32
        $region31: #{tpu_custom_call.1} parent=23 // pred_region
          _
        $region32: #{tpu_custom_call.1} parent=23 // pred_fallthru
          _
        // Predicated region
        $region33: #{tpu_custom_call.1} parent=23 // pred_check
          %p198 = pneg %p87
        $region34: #{tpu_custom_call.1} parent=23 // pred_check_branch
          %200 = sbr.rel (%p198) target = $region36
        $region35: #{tpu_custom_call.1} parent=23 // pred_region
          _
        $region36: #{tpu_custom_call.1} parent=23 // pred_fallthru
          _
      $region24: #{tpu_custom_call.1} parent=5 // pred_fallthru
        _
      %p201 = scmp.le.s32.totalorder 2, %s12
      // Predicated region
      $region37: #{tpu_custom_call.1} parent=5 // pred_check
        %p202 = pneg %p201
      $region38: #{tpu_custom_call.1} parent=5 // pred_check_branch
        %204 = sbr.rel (%p202) target = $region40
      $region39: #{tpu_custom_call.1} parent=5 // pred_region
        %s205 = ssub.s32 %s12, 2
        // Predicated region
        $region41: #{tpu_custom_call.1} parent=39 // pred_check
          %p206 = pneg %p67
        $region42: #{tpu_custom_call.1} parent=39 // pred_check_branch
          %208 = sbr.rel (%p206) target = $region44
        $region43: #{tpu_custom_call.1} parent=39 // pred_region
          %p209 = scmp.lt.s32.totalorder %s18, 1
          %s210 = scalar_select %p209, %s18, 1
          %s211 = smul.addr %s210, 4
          %s212 = scalar_lea.vmem %s1, %s211
        $region44: #{tpu_custom_call.1} parent=39 // pred_fallthru
          _
        // Predicated region
        $region45: #{tpu_custom_call.1} parent=39 // pred_check
          %p213 = pneg %p93
        $region46: #{tpu_custom_call.1} parent=39 // pred_check_branch
          %215 = sbr.rel (%p213) target = $region48
        $region47: #{tpu_custom_call.1} parent=39 // pred_region
          %p216 = scmp.lt.s32.totalorder %s18, 1
          %s217 = scalar_select %p216, %s18, 1
          %s218 = smul.addr %s217, 4
          %s219 = scalar_lea.vmem %s2, %s218
        $region48: #{tpu_custom_call.1} parent=39 // pred_fallthru
          _
      $region40: #{tpu_custom_call.1} parent=5 // pred_fallthru
        _
    $region6: #{tpu_custom_call.1} parent=1 // loop_footer
      %s16 = sadd.s32 1, %s12
    $region7: #{tpu_custom_call.1} parent=1 // loop_footer_branch
      %11 = sbr.rel target = $region3
    $region8: #{tpu_custom_call.1} parent=1 // loop_exit
      _
    %220 = vsyncpa [#allocation3], 1
    %s221 = scalar_lea.sflag [#allocation3], 1
    %222 = vsyncpa %s221, 1

</llo_original>
